<compile_context>
chip_gen: v5e
topology: v5e:2x2
jax: 0.10.0
libtpu: 0.0.40
codegen_flags: <defaults>
</compile_context>

<pallas_src>
import jax
import jax.numpy as jnp
from jax import lax
from jax.experimental import pallas as pl
from jax.experimental.pallas import tpu as pltpu

INPUT_DIM = 2
HIDDEN_DIMS = [64, 32]
OUTPUT_DIM = 1

_TILE_CAP = 8192      # per-tile intermediates ~3 MiB -> safe on v5e/v6e/v7x VMEM
_SMALL_BATCH = 256    # below this, a single grid step is cheapest


def _mlp_kernel(x_ref, w1_ref, b1_ref, w2_ref, b2_ref, w3_ref, b3_ref, o_ref):
    x = x_ref[...]                       # [Bt, in_dim=2]  (native layout, no HBM transpose)

    # Layer 1: Linear(2 -> 64) on the MXU, contracting x's last dim.
    # [64, 2] . [Bt, 2]^T -> [64, Bt]  (batch on lanes, lane-dense everywhere after this)
    h1 = lax.dot_general(
        w1_ref[...], x,
        dimension_numbers=(((1,), (1,)), ((), ())),
        preferred_element_type=jnp.float32,
        precision=lax.Precision.HIGHEST,
    ) + b1_ref[...]
    h1 = jnp.maximum(h1, 0.0)
    # TODO(synk): nn.Dropout(p=0.1) is identity at inference (model.eval()); training-mode
    # dropout (pltpu.prng_random_bits mask) intentionally not implemented here.

    # Layer 2: Linear(64 -> 32) on the MXU: [32, 64] . [64, Bt] -> [32, Bt]
    h2 = lax.dot_general(
        w2_ref[...], h1,
        dimension_numbers=(((1,), (0,)), ((), ())),
        preferred_element_type=jnp.float32,
        precision=lax.Precision.HIGHEST,
    ) + b2_ref[...]
    h2 = jnp.maximum(h2, 0.0)

    # Output layer: Linear(32 -> 1) on the MXU: [1, 32] . [32, Bt] -> [1, Bt]
    # (lane-dense output slab; M=1 is one sublane, lanes stay full -> unmasked stores)
    out = lax.dot_general(
        w3_ref[...], h2,
        dimension_numbers=(((1,), (0,)), ((), ())),
        preferred_element_type=jnp.float32,
        precision=lax.Precision.HIGHEST,
    ) + b3_ref[...]
    o_ref[...] = out.astype(o_ref.dtype)


def _choose_tile(B):
    if B < _SMALL_BATCH:
        return B                                   # single grid step
    tile = -(-B // 2)                              # >= 2 tiles (v7x: both TensorCores)
    tile = min(tile, _TILE_CAP)
    tile = -(-tile // 128) * 128                   # lane-aligned
    return min(tile, _TILE_CAP)


def _forward_impl(x, params, batch_tile=None):
    """Fused MLP forward: x [B, input_dim] -> [B, output_dim]."""
    w1, b1, w2, b2, w3, b3 = params                # weights [out, in], biases [out, 1]
    B, in_dim = x.shape
    h1_dim = w1.shape[0]
    h2_dim = w2.shape[0]
    out_dim = w3.shape[0]
    assert w1.shape[1] == in_dim

    tile = _choose_tile(B) if batch_tile is None else int(batch_tile)
    if tile >= B:
        tile, num_tiles = B, 1
    else:
        assert tile % 128 == 0, "multi-tile batch_tile must be lane-aligned (x128)"
        num_tiles = -(-B // tile)                  # ceil-div: ragged tails handled by padding
    B_pad = tile * num_tiles
    if B_pad != B:
        x = jnp.pad(x, ((0, B_pad - B), (0, 0)))

    def full_spec(shape):
        return pl.BlockSpec(shape, lambda i: (0,) * len(shape))

    outT = pl.pallas_call(
        _mlp_kernel,
        out_shape=jax.ShapeDtypeStruct((out_dim, B_pad), x.dtype),
        grid_spec=pltpu.PrefetchScalarGridSpec(
            num_scalar_prefetch=0,
            grid=(num_tiles,),
            in_specs=[
                pl.BlockSpec((tile, in_dim), lambda i: (i, 0)),   # x: native [B, 2] layout
                full_spec((h1_dim, in_dim)),
                full_spec((h1_dim, 1)),
                full_spec((h2_dim, h1_dim)),
                full_spec((h2_dim, 1)),
                full_spec((out_dim, h2_dim)),
                full_spec((out_dim, 1)),
            ],
            out_specs=pl.BlockSpec((out_dim, tile), lambda i: (0, i)),
        ),
        compiler_params=pltpu.CompilerParams(
            dimension_semantics=("parallel",),
        ),
    )(x, w1, b1, w2, b2, w3, b3)

    return outT[:, :B].T                           # [B, out_dim] (out_dim==1 -> free reshape)


# jit-fuse pad + pallas_call + slice/transpose into a single XLA program
# (dominant win for small/medium batches where dispatch overhead rules).
linear_reward_model_forward = jax.jit(_forward_impl, static_argnames=("batch_tile",))


def init_params(key, input_dim=INPUT_DIM, hidden_dims=HIDDEN_DIMS,
                output_dim=OUTPUT_DIM, dtype=jnp.float32):
    """Deterministic init mimicking PyTorch nn.Linear default (uniform +-1/sqrt(fan_in)).
    Weights stored as [out, in] (PyTorch layout); biases as [out, 1]."""
    dims = [input_dim] + list(hidden_dims) + [output_dim]
    params = []
    for fan_in, fan_out in zip(dims[:-1], dims[1:]):
        key, kw, kb = jax.random.split(key, 3)
        bound = 1.0 / (fan_in ** 0.5)
        w = jax.random.uniform(kw, (fan_out, fan_in), dtype, -bound, bound)
        b = jax.random.uniform(kb, (fan_out, 1), dtype, -bound, bound)
        params += [w, b]
    return tuple(params)


def _reference_forward(x, params):
    w1, b1, w2, b2, w3, b3 = params
    h1 = jnp.maximum(x @ w1.T + b1.T, 0.0)
    h2 = jnp.maximum(h1 @ w2.T + b2.T, 0.0)
    return h2 @ w3.T + b3.T


if __name__ == "__main__":
    key = jax.random.PRNGKey(0)
    k_params, k_x1, k_x2, k_x3 = jax.random.split(key, 4)

    params = init_params(k_params)

    # Small demo batch: single grid step, no tiling.
    B = 16  # batch of (llama_reward, gemini_similarity) feature pairs
    x = jax.random.normal(k_x1, (B, INPUT_DIM), dtype=jnp.float32)
    out = jax.block_until_ready(linear_reward_model_forward(x, params))
    ref = _reference_forward(x, params)
    assert out.shape == (B, OUTPUT_DIM)
    assert jnp.allclose(out, ref, atol=1e-4, rtol=1e-4), "mismatch vs reference (B=16)"

    # Tiled path: B=256 splits into 2 lane-aligned tiles of 128 (v7x megacore path).
    B2 = 256
    x2 = jax.random.normal(k_x2, (B2, INPUT_DIM), dtype=jnp.float32)
    out2 = jax.block_until_ready(linear_reward_model_forward(x2, params))
    ref2 = _reference_forward(x2, params)
    assert out2.shape == (B2, OUTPUT_DIM)
    assert jnp.allclose(out2, ref2, atol=1e-4, rtol=1e-4), "mismatch vs reference (B=256)"

    # Ragged batch: padded to a whole number of tiles, tail sliced off.
    B3 = 300
    x3 = jax.random.normal(k_x3, (B3, INPUT_DIM), dtype=jnp.float32)
    out3 = jax.block_until_ready(linear_reward_model_forward(x3, params))
    ref3 = _reference_forward(x3, params)
    assert out3.shape == (B3, OUTPUT_DIM)
    assert jnp.allclose(out3, ref3, atol=1e-4, rtol=1e-4), "mismatch vs reference (B=300)"

    print("KERNEL_OK")
</pallas_src>

<mosaic_0001>
module attributes {stable_mosaic.version = 11 : i64} {
  func.func @_mlp_kernel(%arg0: i32, %arg1: memref<16x2xf32, #tpu.memory_space<vmem>>, %arg2: memref<64x2xf32, #tpu.memory_space<vmem>>, %arg3: memref<64x1xf32, #tpu.memory_space<vmem>>, %arg4: memref<32x64xf32, #tpu.memory_space<vmem>>, %arg5: memref<32x1xf32, #tpu.memory_space<vmem>>, %arg6: memref<1x32xf32, #tpu.memory_space<vmem>>, %arg7: memref<1x1xf32, #tpu.memory_space<vmem>>, %arg8: memref<1x16xf32, #tpu.memory_space<vmem>>) attributes {dimension_semantics = [#tpu.dimension_semantics<parallel>], iteration_bounds = array<i64: 1>, scalar_prefetch = 0 : i64, scratch_operands = 0 : i64, tpu.core_type = #tpu.core_type<tc>, window_params = [{transform_indices = @transform_0, window_bounds = array<i64: 16, 2>}, {pipeline_mode = #tpu.pipeline_mode<synchronous>, transform_indices = @transform_1, window_bounds = array<i64: 64, 2>}, {pipeline_mode = #tpu.pipeline_mode<synchronous>, transform_indices = @transform_2, window_bounds = array<i64: 64, 1>}, {pipeline_mode = #tpu.pipeline_mode<synchronous>, transform_indices = @transform_3, window_bounds = array<i64: 32, 64>}, {pipeline_mode = #tpu.pipeline_mode<synchronous>, transform_indices = @transform_4, window_bounds = array<i64: 32, 1>}, {pipeline_mode = #tpu.pipeline_mode<synchronous>, transform_indices = @transform_5, window_bounds = array<i64: 1, 32>}, {pipeline_mode = #tpu.pipeline_mode<synchronous>, transform_indices = @transform_6, window_bounds = array<i64: 1, 1>}, {transform_indices = @transform_7, window_bounds = array<i64: 1, 16>}]} {
    %c0 = arith.constant 0 : index
    %c0_0 = arith.constant 0 : index
    %0 = vector.load %arg1[%c0, %c0_0] : memref<16x2xf32, #tpu.memory_space<vmem>>, vector<16x2xf32>
    %c0_1 = arith.constant 0 : index
    %c0_2 = arith.constant 0 : index
    %1 = vector.load %arg2[%c0_1, %c0_2] : memref<64x2xf32, #tpu.memory_space<vmem>>, vector<64x2xf32>
    %cst = arith.constant dense<0.000000e+00> : vector<64x16xf32>
    %2 = tpu.matmul %1, %0, %cst {dimension_numbers = #tpu.dot_dimension_numbers<[1], [1], [0], [0], [0, 0, 1, 0], [], []>, precision = #tpu.contract_precision<fp32>} : vector<64x2xf32>, vector<16x2xf32>, vector<64x16xf32> -> vector<64x16xf32>
    %c0_3 = arith.constant 0 : index
    %c0_4 = arith.constant 0 : index
    %3 = vector.load %arg3[%c0_3, %c0_4] : memref<64x1xf32, #tpu.memory_space<vmem>>, vector<64x1xf32>
    %4 = vector.broadcast %3 : vector<64x1xf32> to vector<64x16xf32>
    %5 = arith.addf %2, %4 : vector<64x16xf32>
    %cst_5 = arith.constant 0.000000e+00 : f32
    %6 = vector.broadcast %cst_5 : f32 to vector<64x16xf32>
    %7 = arith.maximumf %5, %6 : vector<64x16xf32>
    %c0_6 = arith.constant 0 : index
    %c0_7 = arith.constant 0 : index
    %8 = vector.load %arg4[%c0_6, %c0_7] : memref<32x64xf32, #tpu.memory_space<vmem>>, vector<32x64xf32>
    %cst_8 = arith.constant dense<0.000000e+00> : vector<32x16xf32>
    %9 = tpu.matmul %8, %7, %cst_8 {dimension_numbers = #tpu.dot_dimension_numbers<[1], [0], [0], [1], [0, 0, 1, 1], [], []>, precision = #tpu.contract_precision<fp32>} : vector<32x64xf32>, vector<64x16xf32>, vector<32x16xf32> -> vector<32x16xf32>
    %c0_9 = arith.constant 0 : index
    %c0_10 = arith.constant 0 : index
    %10 = vector.load %arg5[%c0_9, %c0_10] : memref<32x1xf32, #tpu.memory_space<vmem>>, vector<32x1xf32>
    %11 = vector.broadcast %10 : vector<32x1xf32> to vector<32x16xf32>
    %12 = arith.addf %9, %11 : vector<32x16xf32>
    %cst_11 = arith.constant 0.000000e+00 : f32
    %13 = vector.broadcast %cst_11 : f32 to vector<32x16xf32>
    %14 = arith.maximumf %12, %13 : vector<32x16xf32>
    %c0_12 = arith.constant 0 : index
    %c0_13 = arith.constant 0 : index
    %15 = vector.load %arg6[%c0_12, %c0_13] : memref<1x32xf32, #tpu.memory_space<vmem>>, vector<1x32xf32>
    %cst_14 = arith.constant dense<0.000000e+00> : vector<1x16xf32>
    %16 = tpu.matmul %15, %14, %cst_14 {dimension_numbers = #tpu.dot_dimension_numbers<[1], [0], [0], [1], [0, 0, 1, 1], [], []>, precision = #tpu.contract_precision<fp32>} : vector<1x32xf32>, vector<32x16xf32>, vector<1x16xf32> -> vector<1x16xf32>
    %c0_15 = arith.constant 0 : index
    %c0_16 = arith.constant 0 : index
    %17 = vector.load %arg7[%c0_15, %c0_16] : memref<1x1xf32, #tpu.memory_space<vmem>>, vector<1x1xf32>
    %18 = vector.broadcast %17 : vector<1x1xf32> to vector<1x16xf32>
    %19 = arith.addf %16, %18 : vector<1x16xf32>
    %c0_17 = arith.constant 0 : index
    %c0_18 = arith.constant 0 : index
    %20 = vector.load %arg8[%c0_17, %c0_18] : memref<1x16xf32, #tpu.memory_space<vmem>>, vector<1x16xf32>
    tpu.vector_store %arg8[%c0_17, %c0_18], %19 {strides = array<i32>} : memref<1x16xf32, #tpu.memory_space<vmem>>, vector<1x16xf32>,
    return
  }
  func.func @transform_0(%arg0: i32) -> (i32, i32) {
    %c0_i32 = arith.constant 0 : i32
    %c0_i32_0 = arith.constant 0 : i32
    return %arg0, %c0_i32 : i32, i32
  }
  func.func @transform_1(%arg0: i32) -> (i32, i32) {
    %c0_i32 = arith.constant 0 : i32
    %c0_i32_0 = arith.constant 0 : i32
    %c0_i32_1 = arith.constant 0 : i32
    return %c0_i32, %c0_i32_0 : i32, i32
  }
  func.func @transform_2(%arg0: i32) -> (i32, i32) {
    %c0_i32 = arith.constant 0 : i32
    %c0_i32_0 = arith.constant 0 : i32
    %c0_i32_1 = arith.constant 0 : i32
    return %c0_i32, %c0_i32_0 : i32, i32
  }
  func.func @transform_3(%arg0: i32) -> (i32, i32) {
    %c0_i32 = arith.constant 0 : i32
    %c0_i32_0 = arith.constant 0 : i32
    %c0_i32_1 = arith.constant 0 : i32
    return %c0_i32, %c0_i32_0 : i32, i32
  }
  func.func @transform_4(%arg0: i32) -> (i32, i32) {
    %c0_i32 = arith.constant 0 : i32
    %c0_i32_0 = arith.constant 0 : i32
    %c0_i32_1 = arith.constant 0 : i32
    return %c0_i32, %c0_i32_0 : i32, i32
  }
  func.func @transform_5(%arg0: i32) -> (i32, i32) {
    %c0_i32 = arith.constant 0 : i32
    %c0_i32_0 = arith.constant 0 : i32
    %c0_i32_1 = arith.constant 0 : i32
    return %c0_i32, %c0_i32_0 : i32, i32
  }
  func.func @transform_6(%arg0: i32) -> (i32, i32) {
    %c0_i32 = arith.constant 0 : i32
    %c0_i32_0 = arith.constant 0 : i32
    %c0_i32_1 = arith.constant 0 : i32
    return %c0_i32, %c0_i32_0 : i32, i32
  }
  func.func @transform_7(%arg0: i32) -> (i32, i32) {
    %c0_i32 = arith.constant 0 : i32
    %c0_i32_0 = arith.constant 0 : i32
    return %c0_i32, %arg0 : i32, i32
  }
}

</mosaic_0001>

<llo_original>
// kernel: _forward_impl.1
$region0: #{_forward_impl.1}
  #allocation0 [shape = 'u32[]', space=smem, size = 0x4, offset = 0x4, fixed_abs, tag = 'smem constant byte address 0x4 - core index']
  #allocation1 [shape = 'u32[72,128]{1,0:T(1,128)}', space=vmem, size = 0x9000, scoped, tag = 'internal scratch']
  #allocation2 [shape = 'f32[1,1]{1,0:T(1,128)S(1)}', space=vmem, size = 0x200, scoped, tag = 'scoped memory for _forward_impl.1']
  %s0 = inlined_call_operand.vmem [shape: f32[16,2], index: 0, kind: input, shape index: {}]
  %s1 = inlined_call_operand.vmem [shape: f32[64,2], index: 1, kind: input, shape index: {}]
  %s2 = inlined_call_operand.vmem [shape: f32[64,1], index: 2, kind: input, shape index: {}]
  %s3 = inlined_call_operand.vmem [shape: f32[32,64], index: 3, kind: input, shape index: {}]
  %s4 = inlined_call_operand.vmem [shape: f32[32,1], index: 4, kind: input, shape index: {}]
  %s5 = inlined_call_operand.vmem [shape: f32[1,32], index: 5, kind: input, shape index: {}]
  %s6 = inlined_call_operand.<no memory space> [shape: f32[1,1], index: 6, kind: input, shape index: {}]
  %s7 = inlined_call_operand.hbm [shape: f32[1,16], index: 7, kind: output, shape index: {}]
  %s8 = sld [smem:[#allocation0]]
  $region38: #{_forward_impl.1} parent=0
    _
  %s10 = ssub.s32 1, %s8
  %s11 = scalar_select 0, %s10, %s8
  %v12 = vstv %s6
  %13 = vst [vmem:[#allocation2] sm:$0x1] %v12
  $region1: #{_forward_impl.1} parent=0
    #allocation3 [shape = 'u8[512]{0}', space=vmem, size = 0x400, scoped, tag = 'output window, operand 0, single buffered']
    #allocation4 [shape = 's32[1]{0}', space=sflag, size = 0x4, scoped, tag = 'scoped memory for _forward_impl.1']
    %14 = vsyncpa [#allocation4], 0
    // Predicated region
    $region2: #{_forward_impl.1} parent=1 // pred_check
      _
    $region3: #{_forward_impl.1} parent=1 // pred_check_branch
      %16 = sbr.rel (0) target = $region5
    $region4: #{_forward_impl.1} parent=1 // pred_region
      _
    $region5: #{_forward_impl.1} parent=1 // pred_fallthru
      _
    // Predicated region
    $region6: #{_forward_impl.1} parent=1 // pred_check
      _
    $region7: #{_forward_impl.1} parent=1 // pred_check_branch
      %18 = sbr.rel (0) target = $region9
    $region8: #{_forward_impl.1} parent=1 // pred_region
      _
    $region9: #{_forward_impl.1} parent=1 // pred_fallthru
      _
    // Predicated region
    $region10: #{_forward_impl.1} parent=1 // pred_check
      _
    $region11: #{_forward_impl.1} parent=1 // pred_check_branch
      %20 = sbr.rel (0) target = $region13
    $region12: #{_forward_impl.1} parent=1 // pred_region
      _
    $region13: #{_forward_impl.1} parent=1 // pred_fallthru
      _
    // Predicated region
    $region14: #{_forward_impl.1} parent=1 // pred_check
      _
    $region15: #{_forward_impl.1} parent=1 // pred_check_branch
      %22 = sbr.rel (0) target = $region17
    $region16: #{_forward_impl.1} parent=1 // pred_region
      _
    $region17: #{_forward_impl.1} parent=1 // pred_fallthru
      _
    // Predicated region
    $region18: #{_forward_impl.1} parent=1 // pred_check
      _
    $region19: #{_forward_impl.1} parent=1 // pred_check_branch
      %24 = sbr.rel (0) target = $region21
    $region20: #{_forward_impl.1} parent=1 // pred_region
      _
    $region21: #{_forward_impl.1} parent=1 // pred_fallthru
      _
    // Predicated region
    $region22: #{_forward_impl.1} parent=1 // pred_check
      _
    $region23: #{_forward_impl.1} parent=1 // pred_check_branch
      %26 = sbr.rel (0) target = $region25
    $region24: #{_forward_impl.1} parent=1 // pred_region
      _
    $region25: #{_forward_impl.1} parent=1 // pred_fallthru
      _
    // Predicated region
    $region26: #{_forward_impl.1} parent=1 // pred_check
      _
    $region27: #{_forward_impl.1} parent=1 // pred_check_branch
      %28 = sbr.rel (0) target = $region29
    $region28: #{_forward_impl.1} parent=1 // pred_region
      _
    $region29: #{_forward_impl.1} parent=1 // pred_fallthru
      _
    %v29 = vld [vmem:[%s0] sm:$0xff]
    %v30 = vld [vmem:[%s0 + $0x8] sm:$0xff]
    %v31 = vld [vmem:[%s1] sm:$0xff]
    %v32 = vld [vmem:[%s1 + $0x8] sm:$0xff]
    %v33 = vld [vmem:[%s1 + $0x10] sm:$0xff]
    %v34 = vld [vmem:[%s1 + $0x18] sm:$0xff]
    %v35 = vld [vmem:[%s1 + $0x20] sm:$0xff]
    %v36 = vld [vmem:[%s1 + $0x28] sm:$0xff]
    %v37 = vld [vmem:[%s1 + $0x30] sm:$0xff]
    %v38 = vld [vmem:[%s1 + $0x38] sm:$0xff]
    %v39 = vld [vmem:[%s2] sm:$0xff]
    %v40 = vld [vmem:[%s2 + $0x8] sm:$0xff]
    %v41 = vld [vmem:[%s2 + $0x10] sm:$0xff]
    %v42 = vld [vmem:[%s2 + $0x18] sm:$0xff]
    %v43 = vld [vmem:[%s2 + $0x20] sm:$0xff]
    %v44 = vld [vmem:[%s2 + $0x28] sm:$0xff]
    %v45 = vld [vmem:[%s2 + $0x30] sm:$0xff]
    %v46 = vld [vmem:[%s2 + $0x38] sm:$0xff]
    %48 = vset.pattern.permute.xlu0 0
    %49 = vperm.xlu0 %48, %v39
    %v50 = vpop.permute.xlu0 %49
    %53 = vset.pattern.permute.xlu0 0
    %54 = vperm.xlu0 %53, %v40
    %v55 = vpop.permute.xlu0 %54
    %58 = vset.pattern.permute.xlu0 0
    %59 = vperm.xlu0 %58, %v41
    %v60 = vpop.permute.xlu0 %59
    %63 = vset.pattern.permute.xlu0 0
    %64 = vperm.xlu0 %63, %v42
    %v65 = vpop.permute.xlu0 %64
    %68 = vset.pattern.permute.xlu0 0
    %69 = vperm.xlu0 %68, %v43
    %v70 = vpop.permute.xlu0 %69
    %73 = vset.pattern.permute.xlu0 0
    %74 = vperm.xlu0 %73, %v44
    %v75 = vpop.permute.xlu0 %74
    %78 = vset.pattern.permute.xlu0 0
    %79 = vperm.xlu0 %78, %v45
    %v80 = vpop.permute.xlu0 %79
    %83 = vset.pattern.permute.xlu0 0
    %84 = vperm.xlu0 %83, %v46
    %v85 = vpop.permute.xlu0 %84
    %vm87 = vcmask 15360
    %v89 = vsel %vm87, %v31, 0
    %v92 = vsel %vm87, %v32, 0
    %v95 = vsel %vm87, %v33, 0
    %v98 = vsel %vm87, %v34, 0
    %v101 = vsel %vm87, %v35, 0
    %v104 = vsel %vm87, %v36, 0
    %v107 = vsel %vm87, %v37, 0
    %v110 = vsel %vm87, %v38, 0
    %v113 = vsel %vm87, %v29, 0
    %v116 = vsel %vm87, %v30, 0
    %118 = vmatpush.xpose.msra.mxu0 0.0
    %119 = vmatpush.xpose.msra.mxu0 0.0
    %120 = vmatpush.xpose.msra.mxu0 0.0
    %121 = vmatpush.xpose.msra.mxu0 0.0
    %122 = vmatpush.xpose.msra.mxu0 0.0
    %123 = vmatpush.xpose.msra.mxu0 0.0
    %124 = vmatpush.xpose.msra.mxu0 0.0
    %125 = vmatpush.xpose.msra.mxu0 0.0
    %126 = vmatpush.xpose.msra.mxu0 0.0
    %127 = vmatpush.xpose.msra.mxu0 0.0
    %128 = vmatpush.xpose.msra.mxu0 0.0
    %129 = vmatpush.xpose.msra.mxu0 0.0
    %130 = vmatpush.xpose.msra.mxu0 0.0
    %131 = vmatpush.xpose.msra.mxu0 0.0
    %v132 = vand.u32 %v116, 4294901760
    %133 = vmatpush.xpose.msra.mxu0 %v132
    %v134 = vand.u32 %v113, 4294901760
    %135 = vmatpush.xpose.msra.mxu0 %v134
    %v136 = vand.u32 %v89, 4294901760
    %v137 = vsub.f32 %v89, %v136
    %v138 = vand.u32 %v137, 4294901760
    %v139 = vsub.f32 %v137, %v138
    %v140 = vand.u32 %v139, 4294901760
    %141 = vmatmul.f32.gmra.mxu0 %v140
    %v142 = vpop.f32.mrf.mxu0
    %v143 = vadd.f32 %v50, %v142
    %v144 = vand.u32 %v92, 4294901760
    %v145 = vsub.f32 %v92, %v144
    %v146 = vand.u32 %v145, 4294901760
    %v147 = vsub.f32 %v145, %v146
    %v148 = vand.u32 %v147, 4294901760
    %149 = vmatmul.f32.gmra.mxu0 %v148
    %v150 = vpop.f32.mrf.mxu0
    %v151 = vadd.f32 %v55, %v150
    %v152 = vand.u32 %v95, 4294901760
    %v153 = vsub.f32 %v95, %v152
    %v154 = vand.u32 %v153, 4294901760
    %v155 = vsub.f32 %v153, %v154
    %v156 = vand.u32 %v155, 4294901760
    %157 = vmatmul.f32.gmra.mxu0 %v156
    %v158 = vpop.f32.mrf.mxu0
    %v159 = vadd.f32 %v60, %v158
    %v160 = vand.u32 %v98, 4294901760
    %v161 = vsub.f32 %v98, %v160
    %v162 = vand.u32 %v161, 4294901760
    %v163 = vsub.f32 %v161, %v162
    %v164 = vand.u32 %v163, 4294901760
    %165 = vmatmul.f32.gmra.mxu0 %v164
    %v166 = vpop.f32.mrf.mxu0
    %v167 = vadd.f32 %v65, %v166
    %v168 = vand.u32 %v101, 4294901760
    %v169 = vsub.f32 %v101, %v168
    %v170 = vand.u32 %v169, 4294901760
    %v171 = vsub.f32 %v169, %v170
    %v172 = vand.u32 %v171, 4294901760
    %173 = vmatmul.f32.gmra.mxu0 %v172
    %v174 = vpop.f32.mrf.mxu0
    %v175 = vadd.f32 %v70, %v174
    %v176 = vand.u32 %v104, 4294901760
    %v177 = vsub.f32 %v104, %v176
    %v178 = vand.u32 %v177, 4294901760
    %v179 = vsub.f32 %v177, %v178
    %v180 = vand.u32 %v179, 4294901760
    %181 = vmatmul.f32.gmra.mxu0 %v180
    %v182 = vpop.f32.mrf.mxu0
    %v183 = vadd.f32 %v75, %v182
    %v184 = vand.u32 %v107, 4294901760
    %v185 = vsub.f32 %v107, %v184
    %v186 = vand.u32 %v185, 4294901760
    %v187 = vsub.f32 %v185, %v186
    %v188 = vand.u32 %v187, 4294901760
    %189 = vmatmul.f32.gmra.mxu0 %v188
    %v190 = vpop.f32.mrf.mxu0
    %v191 = vadd.f32 %v80, %v190
    %v192 = vand.u32 %v110, 4294901760
    %v193 = vsub.f32 %v110, %v192
    %v194 = vand.u32 %v193, 4294901760
    %v195 = vsub.f32 %v193, %v194
    %v196 = vand.u32 %v195, 4294901760
    %197 = vmatmul.f32.gmra.mxu0 %v196
    %v198 = vpop.f32.mrf.mxu0
    %v199 = vadd.f32 %v85, %v198
    %200 = vdwg.mxu0
    %201 = vmatpush.xpose.msra.mxu0 0.0
    %202 = vmatpush.xpose.msra.mxu0 0.0
    %203 = vmatpush.xpose.msra.mxu0 0.0
    %204 = vmatpush.xpose.msra.mxu0 0.0
    %205 = vmatpush.xpose.msra.mxu0 0.0
    %206 = vmatpush.xpose.msra.mxu0 0.0
    %207 = vmatpush.xpose.msra.mxu0 0.0
    %208 = vmatpush.xpose.msra.mxu0 0.0
    %209 = vmatpush.xpose.msra.mxu0 0.0
    %210 = vmatpush.xpose.msra.mxu0 0.0
    %211 = vmatpush.xpose.msra.mxu0 0.0
    %212 = vmatpush.xpose.msra.mxu0 0.0
    %213 = vmatpush.xpose.msra.mxu0 0.0
    %214 = vmatpush.xpose.msra.mxu0 0.0
    %v215 = vand.u32 %v116, 4294901760
    %v216 = vsub.f32 %v116, %v215
    %v217 = vand.u32 %v216, 4294901760
    %v218 = vsub.f32 %v216, %v217
    %v219 = vand.u32 %v218, 4294901760
    %220 = vmatpush.xpose.msra.mxu0 %v219
    %v221 = vand.u32 %v113, 4294901760
    %v222 = vsub.f32 %v113, %v221
    %v223 = vand.u32 %v222, 4294901760
    %v224 = vsub.f32 %v222, %v223
    %v225 = vand.u32 %v224, 4294901760
    %226 = vmatpush.xpose.msra.mxu0 %v225
    %v227 = vand.u32 %v89, 4294901760
    %228 = vmatmul.f32.gmra.mxu0 %v227
    %v229 = vpop.f32.mrf.mxu0
    %v230 = vadd.f32 %v143, %v229
    %v231 = vand.u32 %v92, 4294901760
    %232 = vmatmul.f32.gmra.mxu0 %v231
    %v233 = vpop.f32.mrf.mxu0
    %v234 = vadd.f32 %v151, %v233
    %v235 = vand.u32 %v95, 4294901760
    %236 = vmatmul.f32.gmra.mxu0 %v235
    %v237 = vpop.f32.mrf.mxu0
    %v238 = vadd.f32 %v159, %v237
    %v239 = vand.u32 %v98, 4294901760
    %240 = vmatmul.f32.gmra.mxu0 %v239
    %v241 = vpop.f32.mrf.mxu0
    %v242 = vadd.f32 %v167, %v241
    %v243 = vand.u32 %v101, 4294901760
    %244 = vmatmul.f32.gmra.mxu0 %v243
    %v245 = vpop.f32.mrf.mxu0
    %v246 = vadd.f32 %v175, %v245
    %v247 = vand.u32 %v104, 4294901760
    %248 = vmatmul.f32.gmra.mxu0 %v247
    %v249 = vpop.f32.mrf.mxu0
    %v250 = vadd.f32 %v183, %v249
    %v251 = vand.u32 %v107, 4294901760
    %252 = vmatmul.f32.gmra.mxu0 %v251
    %v253 = vpop.f32.mrf.mxu0
    %v254 = vadd.f32 %v191, %v253
    %v255 = vand.u32 %v110, 4294901760
    %256 = vmatmul.f32.gmra.mxu0 %v255
    %v257 = vpop.f32.mrf.mxu0
    %v258 = vadd.f32 %v199, %v257
    %259 = vdwg.mxu0
    %260 = vmatpush.xpose.msra.mxu0 0.0
    %261 = vmatpush.xpose.msra.mxu0 0.0
    %262 = vmatpush.xpose.msra.mxu0 0.0
    %263 = vmatpush.xpose.msra.mxu0 0.0
    %264 = vmatpush.xpose.msra.mxu0 0.0
    %265 = vmatpush.xpose.msra.mxu0 0.0
    %266 = vmatpush.xpose.msra.mxu0 0.0
    %267 = vmatpush.xpose.msra.mxu0 0.0
    %268 = vmatpush.xpose.msra.mxu0 0.0
    %269 = vmatpush.xpose.msra.mxu0 0.0
    %270 = vmatpush.xpose.msra.mxu0 0.0
    %271 = vmatpush.xpose.msra.mxu0 0.0
    %272 = vmatpush.xpose.msra.mxu0 0.0
    %273 = vmatpush.xpose.msra.mxu0 0.0
    %v274 = vand.u32 %v116, 4294901760
    %v275 = vsub.f32 %v116, %v274
    %276 = vmatpush.xpose.msra.mxu0 %v275
    %v277 = vand.u32 %v113, 4294901760
    %v278 = vsub.f32 %v113, %v277
    %279 = vmatpush.xpose.msra.mxu0 %v278
    %v280 = vand.u32 %v89, 4294901760
    %v281 = vsub.f32 %v89, %v280
    %282 = vmatmul.f32.gmra.mxu0 %v281
    %v283 = vpop.f32.mrf.mxu0
    %v284 = vadd.f32 %v230, %v283
    %v285 = vand.u32 %v92, 4294901760
    %v286 = vsub.f32 %v92, %v285
    %287 = vmatmul.f32.gmra.mxu0 %v286
    %v288 = vpop.f32.mrf.mxu0
    %v289 = vadd.f32 %v234, %v288
    %v290 = vand.u32 %v95, 4294901760
    %v291 = vsub.f32 %v95, %v290
    %292 = vmatmul.f32.gmra.mxu0 %v291
    %v293 = vpop.f32.mrf.mxu0
    %v294 = vadd.f32 %v238, %v293
    %v295 = vand.u32 %v98, 4294901760
    %v296 = vsub.f32 %v98, %v295
    %297 = vmatmul.f32.gmra.mxu0 %v296
    %v298 = vpop.f32.mrf.mxu0
    %v299 = vadd.f32 %v242, %v298
    %v300 = vand.u32 %v101, 4294901760
    %v301 = vsub.f32 %v101, %v300
    %302 = vmatmul.f32.gmra.mxu0 %v301
    %v303 = vpop.f32.mrf.mxu0
    %v304 = vadd.f32 %v246, %v303
    %v305 = vand.u32 %v104, 4294901760
    %v306 = vsub.f32 %v104, %v305
    %307 = vmatmul.f32.gmra.mxu0 %v306
    %v308 = vpop.f32.mrf.mxu0
    %v309 = vadd.f32 %v250, %v308
    %v310 = vand.u32 %v107, 4294901760
    %v311 = vsub.f32 %v107, %v310
    %312 = vmatmul.f32.gmra.mxu0 %v311
    %v313 = vpop.f32.mrf.mxu0
    %v314 = vadd.f32 %v254, %v313
    %v315 = vand.u32 %v110, 4294901760
    %v316 = vsub.f32 %v110, %v315
    %317 = vmatmul.f32.gmra.mxu0 %v316
    %v318 = vpop.f32.mrf.mxu0
    %v319 = vadd.f32 %v258, %v318
    %320 = vdwg.mxu0
    %321 = vmatpush.xpose.msra.mxu0 0.0
    %322 = vmatpush.xpose.msra.mxu0 0.0
    %323 = vmatpush.xpose.msra.mxu0 0.0
    %324 = vmatpush.xpose.msra.mxu0 0.0
    %325 = vmatpush.xpose.msra.mxu0 0.0
    %326 = vmatpush.xpose.msra.mxu0 0.0
    %327 = vmatpush.xpose.msra.mxu0 0.0
    %328 = vmatpush.xpose.msra.mxu0 0.0
    %329 = vmatpush.xpose.msra.mxu0 0.0
    %330 = vmatpush.xpose.msra.mxu0 0.0
    %331 = vmatpush.xpose.msra.mxu0 0.0
    %332 = vmatpush.xpose.msra.mxu0 0.0
    %333 = vmatpush.xpose.msra.mxu0 0.0
    %334 = vmatpush.xpose.msra.mxu0 0.0
    %v335 = vand.u32 %v116, 4294901760
    %336 = vmatpush.xpose.msra.mxu0 %v335
    %v337 = vand.u32 %v113, 4294901760
    %338 = vmatpush.xpose.msra.mxu0 %v337
    %v339 = vand.u32 %v89, 4294901760
    %v340 = vsub.f32 %v89, %v339
    %v341 = vand.u32 %v340, 4294901760
    %342 = vmatmul.f32.gmra.mxu0 %v341
    %v343 = vpop.f32.mrf.mxu0
    %v344 = vadd.f32 %v284, %v343
    %v345 = vand.u32 %v92, 4294901760
    %v346 = vsub.f32 %v92, %v345
    %v347 = vand.u32 %v346, 4294901760
    %348 = vmatmul.f32.gmra.mxu0 %v347
    %v349 = vpop.f32.mrf.mxu0
    %v350 = vadd.f32 %v289, %v349
    %v351 = vand.u32 %v95, 4294901760
    %v352 = vsub.f32 %v95, %v351
    %v353 = vand.u32 %v352, 4294901760
    %354 = vmatmul.f32.gmra.mxu0 %v353
    %v355 = vpop.f32.mrf.mxu0
    %v356 = vadd.f32 %v294, %v355
    %v357 = vand.u32 %v98, 4294901760
    %v358 = vsub.f32 %v98, %v357
    %v359 = vand.u32 %v358, 4294901760
    %360 = vmatmul.f32.gmra.mxu0 %v359
    %v361 = vpop.f32.mrf.mxu0
    %v362 = vadd.f32 %v299, %v361
    %v363 = vand.u32 %v101, 4294901760
    %v364 = vsub.f32 %v101, %v363
    %v365 = vand.u32 %v364, 4294901760
    %366 = vmatmul.f32.gmra.mxu0 %v365
    %v367 = vpop.f32.mrf.mxu0
    %v368 = vadd.f32 %v304, %v367
    %v369 = vand.u32 %v104, 4294901760
    %v370 = vsub.f32 %v104, %v369
    %v371 = vand.u32 %v370, 4294901760
    %372 = vmatmul.f32.gmra.mxu0 %v371
    %v373 = vpop.f32.mrf.mxu0
    %v374 = vadd.f32 %v309, %v373
    %v375 = vand.u32 %v107, 4294901760
    %v376 = vsub.f32 %v107, %v375
    %v377 = vand.u32 %v376, 4294901760
    %378 = vmatmul.f32.gmra.mxu0 %v377
    %v379 = vpop.f32.mrf.mxu0
    %v380 = vadd.f32 %v314, %v379
    %v381 = vand.u32 %v110, 4294901760
    %v382 = vsub.f32 %v110, %v381
    %v383 = vand.u32 %v382, 4294901760
    %384 = vmatmul.f32.gmra.mxu0 %v383
    %v385 = vpop.f32.mrf.mxu0
    %v386 = vadd.f32 %v319, %v385
    %387 = vdwg.mxu0
    %388 = vmatpush.xpose.msra.mxu0 0.0
    %389 = vmatpush.xpose.msra.mxu0 0.0
    %390 = vmatpush.xpose.msra.mxu0 0.0
    %391 = vmatpush.xpose.msra.mxu0 0.0
    %392 = vmatpush.xpose.msra.mxu0 0.0
    %393 = vmatpush.xpose.msra.mxu0 0.0
    %394 = vmatpush.xpose.msra.mxu0 0.0
    %395 = vmatpush.xpose.msra.mxu0 0.0
    %396 = vmatpush.xpose.msra.mxu0 0.0
    %397 = vmatpush.xpose.msra.mxu0 0.0
    %398 = vmatpush.xpose.msra.mxu0 0.0
    %399 = vmatpush.xpose.msra.mxu0 0.0
    %400 = vmatpush.xpose.msra.mxu0 0.0
    %401 = vmatpush.xpose.msra.mxu0 0.0
    %v402 = vand.u32 %v116, 4294901760
    %v403 = vsub.f32 %v116, %v402
    %v404 = vand.u32 %v403, 4294901760
    %405 = vmatpush.xpose.msra.mxu0 %v404
    %v406 = vand.u32 %v113, 4294901760
    %v407 = vsub.f32 %v113, %v406
    %v408 = vand.u32 %v407, 4294901760
    %409 = vmatpush.xpose.msra.mxu0 %v408
    %v410 = vand.u32 %v89, 4294901760
    %411 = vmatmul.f32.gmra.mxu0 %v410
    %v412 = vpop.f32.mrf.mxu0
    %v413 = vadd.f32 %v344, %v412
    %v414 = vand.u32 %v92, 4294901760
    %415 = vmatmul.f32.gmra.mxu0 %v414
    %v416 = vpop.f32.mrf.mxu0
    %v417 = vadd.f32 %v350, %v416
    %v418 = vand.u32 %v95, 4294901760
    %419 = vmatmul.f32.gmra.mxu0 %v418
    %v420 = vpop.f32.mrf.mxu0
    %v421 = vadd.f32 %v356, %v420
    %v422 = vand.u32 %v98, 4294901760
    %423 = vmatmul.f32.gmra.mxu0 %v422
    %v424 = vpop.f32.mrf.mxu0
    %v425 = vadd.f32 %v362, %v424
    %v426 = vand.u32 %v101, 4294901760
    %427 = vmatmul.f32.gmra.mxu0 %v426
    %v428 = vpop.f32.mrf.mxu0
    %v429 = vadd.f32 %v368, %v428
    %v430 = vand.u32 %v104, 4294901760
    %431 = vmatmul.f32.gmra.mxu0 %v430
    %v432 = vpop.f32.mrf.mxu0
    %v433 = vadd.f32 %v374, %v432
    %v434 = vand.u32 %v107, 4294901760
    %435 = vmatmul.f32.gmra.mxu0 %v434
    %v436 = vpop.f32.mrf.mxu0
    %v437 = vadd.f32 %v380, %v436
    %v438 = vand.u32 %v110, 4294901760
    %439 = vmatmul.f32.gmra.mxu0 %v438
    %v440 = vpop.f32.mrf.mxu0
    %v441 = vadd.f32 %v386, %v440
    %442 = vdwg.mxu0
    %443 = vmatpush.xpose.msra.mxu0 0.0
    %444 = vmatpush.xpose.msra.mxu0 0.0
    %445 = vmatpush.xpose.msra.mxu0 0.0
    %446 = vmatpush.xpose.msra.mxu0 0.0
    %447 = vmatpush.xpose.msra.mxu0 0.0
    %448 = vmatpush.xpose.msra.mxu0 0.0
    %449 = vmatpush.xpose.msra.mxu0 0.0
    %450 = vmatpush.xpose.msra.mxu0 0.0
    %451 = vmatpush.xpose.msra.mxu0 0.0
    %452 = vmatpush.xpose.msra.mxu0 0.0
    %453 = vmatpush.xpose.msra.mxu0 0.0
    %454 = vmatpush.xpose.msra.mxu0 0.0
    %455 = vmatpush.xpose.msra.mxu0 0.0
    %456 = vmatpush.xpose.msra.mxu0 0.0
    %v457 = vand.u32 %v116, 4294901760
    %458 = vmatpush.xpose.msra.mxu0 %v457
    %v459 = vand.u32 %v113, 4294901760
    %460 = vmatpush.xpose.msra.mxu0 %v459
    %v461 = vand.u32 %v89, 4294901760
    %462 = vmatmul.f32.gmra.mxu0 %v461
    %v463 = vpop.f32.mrf.mxu0
    %v464 = vadd.f32 %v413, %v463
    %v465 = vand.u32 %v92, 4294901760
    %466 = vmatmul.f32.gmra.mxu0 %v465
    %v467 = vpop.f32.mrf.mxu0
    %v468 = vadd.f32 %v417, %v467
    %v469 = vand.u32 %v95, 4294901760
    %470 = vmatmul.f32.gmra.mxu0 %v469
    %v471 = vpop.f32.mrf.mxu0
    %v472 = vadd.f32 %v421, %v471
    %v473 = vand.u32 %v98, 4294901760
    %474 = vmatmul.f32.gmra.mxu0 %v473
    %v475 = vpop.f32.mrf.mxu0
    %v476 = vadd.f32 %v425, %v475
    %v477 = vand.u32 %v101, 4294901760
    %478 = vmatmul.f32.gmra.mxu0 %v477
    %v479 = vpop.f32.mrf.mxu0
    %v480 = vadd.f32 %v429, %v479
    %v481 = vand.u32 %v104, 4294901760
    %482 = vmatmul.f32.gmra.mxu0 %v481
    %v483 = vpop.f32.mrf.mxu0
    %v484 = vadd.f32 %v433, %v483
    %v485 = vand.u32 %v107, 4294901760
    %486 = vmatmul.f32.gmra.mxu0 %v485
    %v487 = vpop.f32.mrf.mxu0
    %v488 = vadd.f32 %v437, %v487
    %v489 = vand.u32 %v110, 4294901760
    %490 = vmatmul.f32.gmra.mxu0 %v489
    %v491 = vpop.f32.mrf.mxu0
    %v492 = vadd.f32 %v441, %v491
    %493 = vdwg.mxu0
    %v494 = vmax.f32 %v464, 0.0
    %v495 = vmax.f32 %v468, 0.0
    %v496 = vmax.f32 %v472, 0.0
    %v497 = vmax.f32 %v476, 0.0
    %v498 = vmax.f32 %v480, 0.0
    %v499 = vmax.f32 %v484, 0.0
    %v500 = vmax.f32 %v488, 0.0
    %v501 = vmax.f32 %v492, 0.0
    %v502 = vld [vmem:[%s3] sm:$0xff]
    %v503 = vld [vmem:[%s3 + $0x8] sm:$0xff]
    %v504 = vld [vmem:[%s3 + $0x10] sm:$0xff]
    %v505 = vld [vmem:[%s3 + $0x18] sm:$0xff]
    %v506 = vld [vmem:[%s4] sm:$0xff]
    %v507 = vld [vmem:[%s4 + $0x8] sm:$0xff]
    %v508 = vld [vmem:[%s4 + $0x10] sm:$0xff]
    %v509 = vld [vmem:[%s4 + $0x18] sm:$0xff]
    %511 = vset.pattern.permute.xlu0 0
    %512 = vperm.xlu0 %511, %v506
    %v513 = vpop.permute.xlu0 %512
    %516 = vset.pattern.permute.xlu0 0
    %517 = vperm.xlu0 %516, %v507
    %v518 = vpop.permute.xlu0 %517
    %521 = vset.pattern.permute.xlu0 0
    %522 = vperm.xlu0 %521, %v508
    %v523 = vpop.permute.xlu0 %522
    %526 = vset.pattern.permute.xlu0 0
    %527 = vperm.xlu0 %526, %v509
    %v528 = vpop.permute.xlu0 %527
    %vm530 = vcmask 523264
    %v532 = vsel %vm530, %v502, 0
    %v535 = vsel %vm530, %v503, 0
    %v538 = vsel %vm530, %v504, 0
    %v541 = vsel %vm530, %v505, 0
    %543 = vmatpush.msra.mxu0 0.0
    %544 = vmatpush.msra.mxu0 0.0
    %545 = vmatpush.msra.mxu0 0.0
    %546 = vmatpush.msra.mxu0 0.0
    %547 = vmatpush.msra.mxu0 0.0
    %548 = vmatpush.msra.mxu0 0.0
    %549 = vmatpush.msra.mxu0 0.0
    %550 = vmatpush.msra.mxu0 0.0
    %v551 = vand.u32 %v501, 4294901760
    %552 = vmatpush.msra.mxu0 %v551
    %v553 = vand.u32 %v500, 4294901760
    %554 = vmatpush.msra.mxu0 %v553
    %v555 = vand.u32 %v499, 4294901760
    %556 = vmatpush.msra.mxu0 %v555
    %v557 = vand.u32 %v498, 4294901760
    %558 = vmatpush.msra.mxu0 %v557
    %v559 = vand.u32 %v497, 4294901760
    %560 = vmatpush.msra.mxu0 %v559
    %v561 = vand.u32 %v496, 4294901760
    %562 = vmatpush.msra.mxu0 %v561
    %v563 = vand.u32 %v495, 4294901760
    %564 = vmatpush.msra.mxu0 %v563
    %v565 = vand.u32 %v494, 4294901760
    %566 = vmatpush.msra.mxu0 %v565
    %v567 = vand.u32 %v532, 4294901760
    %v568 = vsub.f32 %v532, %v567
    %v569 = vand.u32 %v568, 4294901760
    %v570 = vsub.f32 %v568, %v569
    %v571 = vand.u32 %v570, 4294901760
    %572 = vmatmul.f32.gmra.mxu0 %v571
    %v573 = vpop.f32.mrf.mxu0
    %v574 = vadd.f32 %v513, %v573
    %v575 = vand.u32 %v535, 4294901760
    %v576 = vsub.f32 %v535, %v575
    %v577 = vand.u32 %v576, 4294901760
    %v578 = vsub.f32 %v576, %v577
    %v579 = vand.u32 %v578, 4294901760
    %580 = vmatmul.f32.gmra.mxu0 %v579
    %v581 = vpop.f32.mrf.mxu0
    %v582 = vadd.f32 %v518, %v581
    %v583 = vand.u32 %v538, 4294901760
    %v584 = vsub.f32 %v538, %v583
    %v585 = vand.u32 %v584, 4294901760
    %v586 = vsub.f32 %v584, %v585
    %v587 = vand.u32 %v586, 4294901760
    %588 = vmatmul.f32.gmra.mxu0 %v587
    %v589 = vpop.f32.mrf.mxu0
    %v590 = vadd.f32 %v523, %v589
    %v591 = vand.u32 %v541, 4294901760
    %v592 = vsub.f32 %v541, %v591
    %v593 = vand.u32 %v592, 4294901760
    %v594 = vsub.f32 %v592, %v593
    %v595 = vand.u32 %v594, 4294901760
    %596 = vmatmul.f32.gmra.mxu0 %v595
    %v597 = vpop.f32.mrf.mxu0
    %v598 = vadd.f32 %v528, %v597
    %599 = vdwg.mxu0
    %600 = vmatpush.msra.mxu0 0.0
    %601 = vmatpush.msra.mxu0 0.0
    %602 = vmatpush.msra.mxu0 0.0
    %603 = vmatpush.msra.mxu0 0.0
    %604 = vmatpush.msra.mxu0 0.0
    %605 = vmatpush.msra.mxu0 0.0
    %606 = vmatpush.msra.mxu0 0.0
    %607 = vmatpush.msra.mxu0 0.0
    %v608 = vand.u32 %v501, 4294901760
    %v609 = vsub.f32 %v501, %v608
    %v610 = vand.u32 %v609, 4294901760
    %v611 = vsub.f32 %v609, %v610
    %v612 = vand.u32 %v611, 4294901760
    %613 = vmatpush.msra.mxu0 %v612
    %v614 = vand.u32 %v500, 4294901760
    %v615 = vsub.f32 %v500, %v614
    %v616 = vand.u32 %v615, 4294901760
    %v617 = vsub.f32 %v615, %v616
    %v618 = vand.u32 %v617, 4294901760
    %619 = vmatpush.msra.mxu0 %v618
    %v620 = vand.u32 %v499, 4294901760
    %v621 = vsub.f32 %v499, %v620
    %v622 = vand.u32 %v621, 4294901760
    %v623 = vsub.f32 %v621, %v622
    %v624 = vand.u32 %v623, 4294901760
    %625 = vmatpush.msra.mxu0 %v624
    %v626 = vand.u32 %v498, 4294901760
    %v627 = vsub.f32 %v498, %v626
    %v628 = vand.u32 %v627, 4294901760
    %v629 = vsub.f32 %v627, %v628
    %v630 = vand.u32 %v629, 4294901760
    %631 = vmatpush.msra.mxu0 %v630
    %v632 = vand.u32 %v497, 4294901760
    %v633 = vsub.f32 %v497, %v632
    %v634 = vand.u32 %v633, 4294901760
    %v635 = vsub.f32 %v633, %v634
    %v636 = vand.u32 %v635, 4294901760
    %637 = vmatpush.msra.mxu0 %v636
    %v638 = vand.u32 %v496, 4294901760
    %v639 = vsub.f32 %v496, %v638
    %v640 = vand.u32 %v639, 4294901760
    %v641 = vsub.f32 %v639, %v640
    %v642 = vand.u32 %v641, 4294901760
    %643 = vmatpush.msra.mxu0 %v642
    %v644 = vand.u32 %v495, 4294901760
    %v645 = vsub.f32 %v495, %v644
    %v646 = vand.u32 %v645, 4294901760
    %v647 = vsub.f32 %v645, %v646
    %v648 = vand.u32 %v647, 4294901760
    %649 = vmatpush.msra.mxu0 %v648
    %v650 = vand.u32 %v494, 4294901760
    %v651 = vsub.f32 %v494, %v650
    %v652 = vand.u32 %v651, 4294901760
    %v653 = vsub.f32 %v651, %v652
    %v654 = vand.u32 %v653, 4294901760
    %655 = vmatpush.msra.mxu0 %v654
    %v656 = vand.u32 %v532, 4294901760
    %657 = vmatmul.f32.gmra.mxu0 %v656
    %v658 = vpop.f32.mrf.mxu0
    %v659 = vadd.f32 %v574, %v658
    %v660 = vand.u32 %v535, 4294901760
    %661 = vmatmul.f32.gmra.mxu0 %v660
    %v662 = vpop.f32.mrf.mxu0
    %v663 = vadd.f32 %v582, %v662
    %v664 = vand.u32 %v538, 4294901760
    %665 = vmatmul.f32.gmra.mxu0 %v664
    %v666 = vpop.f32.mrf.mxu0
    %v667 = vadd.f32 %v590, %v666
    %v668 = vand.u32 %v541, 4294901760
    %669 = vmatmul.f32.gmra.mxu0 %v668
    %v670 = vpop.f32.mrf.mxu0
    %v671 = vadd.f32 %v598, %v670
    %672 = vdwg.mxu0
    %673 = vmatpush.msra.mxu0 0.0
    %674 = vmatpush.msra.mxu0 0.0
    %675 = vmatpush.msra.mxu0 0.0
    %676 = vmatpush.msra.mxu0 0.0
    %677 = vmatpush.msra.mxu0 0.0
    %678 = vmatpush.msra.mxu0 0.0
    %679 = vmatpush.msra.mxu0 0.0
    %680 = vmatpush.msra.mxu0 0.0
    %v681 = vand.u32 %v501, 4294901760
    %v682 = vsub.f32 %v501, %v681
    %683 = vmatpush.msra.mxu0 %v682
    %v684 = vand.u32 %v500, 4294901760
    %v685 = vsub.f32 %v500, %v684
    %686 = vmatpush.msra.mxu0 %v685
    %v687 = vand.u32 %v499, 4294901760
    %v688 = vsub.f32 %v499, %v687
    %689 = vmatpush.msra.mxu0 %v688
    %v690 = vand.u32 %v498, 4294901760
    %v691 = vsub.f32 %v498, %v690
    %692 = vmatpush.msra.mxu0 %v691
    %v693 = vand.u32 %v497, 4294901760
    %v694 = vsub.f32 %v497, %v693
    %695 = vmatpush.msra.mxu0 %v694
    %v696 = vand.u32 %v496, 4294901760
    %v697 = vsub.f32 %v496, %v696
    %698 = vmatpush.msra.mxu0 %v697
    %v699 = vand.u32 %v495, 4294901760
    %v700 = vsub.f32 %v495, %v699
    %701 = vmatpush.msra.mxu0 %v700
    %v702 = vand.u32 %v494, 4294901760
    %v703 = vsub.f32 %v494, %v702
    %704 = vmatpush.msra.mxu0 %v703
    %v705 = vand.u32 %v532, 4294901760
    %v706 = vsub.f32 %v532, %v705
    %707 = vmatmul.f32.gmra.mxu0 %v706
    %v708 = vpop.f32.mrf.mxu0
    %v709 = vadd.f32 %v659, %v708
    %v710 = vand.u32 %v535, 4294901760
    %v711 = vsub.f32 %v535, %v710
    %712 = vmatmul.f32.gmra.mxu0 %v711
    %v713 = vpop.f32.mrf.mxu0
    %v714 = vadd.f32 %v663, %v713
    %v715 = vand.u32 %v538, 4294901760
    %v716 = vsub.f32 %v538, %v715
    %717 = vmatmul.f32.gmra.mxu0 %v716
    %v718 = vpop.f32.mrf.mxu0
    %v719 = vadd.f32 %v667, %v718
    %v720 = vand.u32 %v541, 4294901760
    %v721 = vsub.f32 %v541, %v720
    %722 = vmatmul.f32.gmra.mxu0 %v721
    %v723 = vpop.f32.mrf.mxu0
    %v724 = vadd.f32 %v671, %v723
    %725 = vdwg.mxu0
    %726 = vmatpush.msra.mxu0 0.0
    %727 = vmatpush.msra.mxu0 0.0
    %728 = vmatpush.msra.mxu0 0.0
    %729 = vmatpush.msra.mxu0 0.0
    %730 = vmatpush.msra.mxu0 0.0
    %731 = vmatpush.msra.mxu0 0.0
    %732 = vmatpush.msra.mxu0 0.0
    %733 = vmatpush.msra.mxu0 0.0
    %v734 = vand.u32 %v501, 4294901760
    %735 = vmatpush.msra.mxu0 %v734
    %v736 = vand.u32 %v500, 4294901760
    %737 = vmatpush.msra.mxu0 %v736
    %v738 = vand.u32 %v499, 4294901760
    %739 = vmatpush.msra.mxu0 %v738
    %v740 = vand.u32 %v498, 4294901760
    %741 = vmatpush.msra.mxu0 %v740
    %v742 = vand.u32 %v497, 4294901760
    %743 = vmatpush.msra.mxu0 %v742
    %v744 = vand.u32 %v496, 4294901760
    %745 = vmatpush.msra.mxu0 %v744
    %v746 = vand.u32 %v495, 4294901760
    %747 = vmatpush.msra.mxu0 %v746
    %v748 = vand.u32 %v494, 4294901760
    %749 = vmatpush.msra.mxu0 %v748
    %v750 = vand.u32 %v532, 4294901760
    %v751 = vsub.f32 %v532, %v750
    %v752 = vand.u32 %v751, 4294901760
    %753 = vmatmul.f32.gmra.mxu0 %v752
    %v754 = vpop.f32.mrf.mxu0
    %v755 = vadd.f32 %v709, %v754
    %v756 = vand.u32 %v535, 4294901760
    %v757 = vsub.f32 %v535, %v756
    %v758 = vand.u32 %v757, 4294901760
    %759 = vmatmul.f32.gmra.mxu0 %v758
    %v760 = vpop.f32.mrf.mxu0
    %v761 = vadd.f32 %v714, %v760
    %v762 = vand.u32 %v538, 4294901760
    %v763 = vsub.f32 %v538, %v762
    %v764 = vand.u32 %v763, 4294901760
    %765 = vmatmul.f32.gmra.mxu0 %v764
    %v766 = vpop.f32.mrf.mxu0
    %v767 = vadd.f32 %v719, %v766
    %v768 = vand.u32 %v541, 4294901760
    %v769 = vsub.f32 %v541, %v768
    %v770 = vand.u32 %v769, 4294901760
    %771 = vmatmul.f32.gmra.mxu0 %v770
    %v772 = vpop.f32.mrf.mxu0
    %v773 = vadd.f32 %v724, %v772
    %774 = vdwg.mxu0
    %775 = vmatpush.msra.mxu0 0.0
    %776 = vmatpush.msra.mxu0 0.0
    %777 = vmatpush.msra.mxu0 0.0
    %778 = vmatpush.msra.mxu0 0.0
    %779 = vmatpush.msra.mxu0 0.0
    %780 = vmatpush.msra.mxu0 0.0
    %781 = vmatpush.msra.mxu0 0.0
    %782 = vmatpush.msra.mxu0 0.0
    %v783 = vand.u32 %v501, 4294901760
    %v784 = vsub.f32 %v501, %v783
    %v785 = vand.u32 %v784, 4294901760
    %786 = vmatpush.msra.mxu0 %v785
    %v787 = vand.u32 %v500, 4294901760
    %v788 = vsub.f32 %v500, %v787
    %v789 = vand.u32 %v788, 4294901760
    %790 = vmatpush.msra.mxu0 %v789
    %v791 = vand.u32 %v499, 4294901760
    %v792 = vsub.f32 %v499, %v791
    %v793 = vand.u32 %v792, 4294901760
    %794 = vmatpush.msra.mxu0 %v793
    %v795 = vand.u32 %v498, 4294901760
    %v796 = vsub.f32 %v498, %v795
    %v797 = vand.u32 %v796, 4294901760
    %798 = vmatpush.msra.mxu0 %v797
    %v799 = vand.u32 %v497, 4294901760
    %v800 = vsub.f32 %v497, %v799
    %v801 = vand.u32 %v800, 4294901760
    %802 = vmatpush.msra.mxu0 %v801
    %v803 = vand.u32 %v496, 4294901760
    %v804 = vsub.f32 %v496, %v803
    %v805 = vand.u32 %v804, 4294901760
    %806 = vmatpush.msra.mxu0 %v805
    %v807 = vand.u32 %v495, 4294901760
    %v808 = vsub.f32 %v495, %v807
    %v809 = vand.u32 %v808, 4294901760
    %810 = vmatpush.msra.mxu0 %v809
    %v811 = vand.u32 %v494, 4294901760
    %v812 = vsub.f32 %v494, %v811
    %v813 = vand.u32 %v812, 4294901760
    %814 = vmatpush.msra.mxu0 %v813
    %v815 = vand.u32 %v532, 4294901760
    %816 = vmatmul.f32.gmra.mxu0 %v815
    %v817 = vpop.f32.mrf.mxu0
    %v818 = vadd.f32 %v755, %v817
    %v819 = vand.u32 %v535, 4294901760
    %820 = vmatmul.f32.gmra.mxu0 %v819
    %v821 = vpop.f32.mrf.mxu0
    %v822 = vadd.f32 %v761, %v821
    %v823 = vand.u32 %v538, 4294901760
    %824 = vmatmul.f32.gmra.mxu0 %v823
    %v825 = vpop.f32.mrf.mxu0
    %v826 = vadd.f32 %v767, %v825
    %v827 = vand.u32 %v541, 4294901760
    %828 = vmatmul.f32.gmra.mxu0 %v827
    %v829 = vpop.f32.mrf.mxu0
    %v830 = vadd.f32 %v773, %v829
    %831 = vdwg.mxu0
    %832 = vmatpush.msra.mxu0 0.0
    %833 = vmatpush.msra.mxu0 0.0
    %834 = vmatpush.msra.mxu0 0.0
    %835 = vmatpush.msra.mxu0 0.0
    %836 = vmatpush.msra.mxu0 0.0
    %837 = vmatpush.msra.mxu0 0.0
    %838 = vmatpush.msra.mxu0 0.0
    %839 = vmatpush.msra.mxu0 0.0
    %v840 = vand.u32 %v501, 4294901760
    %841 = vmatpush.msra.mxu0 %v840
    %v842 = vand.u32 %v500, 4294901760
    %843 = vmatpush.msra.mxu0 %v842
    %v844 = vand.u32 %v499, 4294901760
    %845 = vmatpush.msra.mxu0 %v844
    %v846 = vand.u32 %v498, 4294901760
    %847 = vmatpush.msra.mxu0 %v846
    %v848 = vand.u32 %v497, 4294901760
    %849 = vmatpush.msra.mxu0 %v848
    %v850 = vand.u32 %v496, 4294901760
    %851 = vmatpush.msra.mxu0 %v850
    %v852 = vand.u32 %v495, 4294901760
    %853 = vmatpush.msra.mxu0 %v852
    %v854 = vand.u32 %v494, 4294901760
    %855 = vmatpush.msra.mxu0 %v854
    %v856 = vand.u32 %v532, 4294901760
    %857 = vmatmul.f32.gmra.mxu0 %v856
    %v858 = vpop.f32.mrf.mxu0
    %v859 = vadd.f32 %v818, %v858
    %v860 = vand.u32 %v535, 4294901760
    %861 = vmatmul.f32.gmra.mxu0 %v860
    %v862 = vpop.f32.mrf.mxu0
    %v863 = vadd.f32 %v822, %v862
    %v864 = vand.u32 %v538, 4294901760
    %865 = vmatmul.f32.gmra.mxu0 %v864
    %v866 = vpop.f32.mrf.mxu0
    %v867 = vadd.f32 %v826, %v866
    %v868 = vand.u32 %v541, 4294901760
    %869 = vmatmul.f32.gmra.mxu0 %v868
    %v870 = vpop.f32.mrf.mxu0
    %v871 = vadd.f32 %v830, %v870
    %872 = vdwg.mxu0
    %v873 = vmax.f32 %v859, 0.0
    %v874 = vmax.f32 %v863, 0.0
    %v875 = vmax.f32 %v867, 0.0
    %v876 = vmax.f32 %v871, 0.0
    %v877 = vld [vmem:[%s5] sm:$0x1]
    %v878 = vld [vmem:[#allocation2] sm:$0x1]
    %880 = vset.pattern.permute.xlu0 0
    %881 = vperm.xlu0 %880, %v878
    %v882 = vpop.permute.xlu0 %881
    %v884 = vperm.slane %v882, 0
    %vm885 = vcmask 261120
    %v887 = vsel %vm885, %v877, 0
    %889 = vmatpush.msra.mxu0 0.0
    %890 = vmatpush.msra.mxu0 0.0
    %891 = vmatpush.msra.mxu0 0.0
    %892 = vmatpush.msra.mxu0 0.0
    %893 = vmatpush.msra.mxu0 0.0
    %894 = vmatpush.msra.mxu0 0.0
    %895 = vmatpush.msra.mxu0 0.0
    %896 = vmatpush.msra.mxu0 0.0
    %897 = vmatpush.msra.mxu0 0.0
    %898 = vmatpush.msra.mxu0 0.0
    %899 = vmatpush.msra.mxu0 0.0
    %900 = vmatpush.msra.mxu0 0.0
    %v901 = vand.u32 %v876, 4294901760
    %902 = vmatpush.msra.mxu0 %v901
    %v903 = vand.u32 %v875, 4294901760
    %904 = vmatpush.msra.mxu0 %v903
    %v905 = vand.u32 %v874, 4294901760
    %906 = vmatpush.msra.mxu0 %v905
    %v907 = vand.u32 %v873, 4294901760
    %908 = vmatpush.msra.mxu0 %v907
    %v909 = vand.u32 %v887, 4294901760
    %v910 = vsub.f32 %v887, %v909
    %v911 = vand.u32 %v910, 4294901760
    %v912 = vsub.f32 %v910, %v911
    %v913 = vand.u32 %v912, 4294901760
    %914 = vmatmul.f32.gmra.mxu0 %v913
    %v915 = vpop.f32.mrf.mxu0
    %v916 = vadd.f32 %v884, %v915
    %917 = vdwg.mxu0
    %918 = vmatpush.msra.mxu0 0.0
    %919 = vmatpush.msra.mxu0 0.0
    %920 = vmatpush.msra.mxu0 0.0
    %921 = vmatpush.msra.mxu0 0.0
    %922 = vmatpush.msra.mxu0 0.0
    %923 = vmatpush.msra.mxu0 0.0
    %924 = vmatpush.msra.mxu0 0.0
    %925 = vmatpush.msra.mxu0 0.0
    %926 = vmatpush.msra.mxu0 0.0
    %927 = vmatpush.msra.mxu0 0.0
    %928 = vmatpush.msra.mxu0 0.0
    %929 = vmatpush.msra.mxu0 0.0
    %v930 = vand.u32 %v876, 4294901760
    %v931 = vsub.f32 %v876, %v930
    %v932 = vand.u32 %v931, 4294901760
    %v933 = vsub.f32 %v931, %v932
    %v934 = vand.u32 %v933, 4294901760
    %935 = vmatpush.msra.mxu0 %v934
    %v936 = vand.u32 %v875, 4294901760
    %v937 = vsub.f32 %v875, %v936
    %v938 = vand.u32 %v937, 4294901760
    %v939 = vsub.f32 %v937, %v938
    %v940 = vand.u32 %v939, 4294901760
    %941 = vmatpush.msra.mxu0 %v940
    %v942 = vand.u32 %v874, 4294901760
    %v943 = vsub.f32 %v874, %v942
    %v944 = vand.u32 %v943, 4294901760
    %v945 = vsub.f32 %v943, %v944
    %v946 = vand.u32 %v945, 4294901760
    %947 = vmatpush.msra.mxu0 %v946
    %v948 = vand.u32 %v873, 4294901760
    %v949 = vsub.f32 %v873, %v948
    %v950 = vand.u32 %v949, 4294901760
    %v951 = vsub.f32 %v949, %v950
    %v952 = vand.u32 %v951, 4294901760
    %953 = vmatpush.msra.mxu0 %v952
    %v954 = vand.u32 %v887, 4294901760
    %955 = vmatmul.f32.gmra.mxu0 %v954
    %v956 = vpop.f32.mrf.mxu0
    %v957 = vadd.f32 %v916, %v956
    %958 = vdwg.mxu0
    %959 = vmatpush.msra.mxu0 0.0
    %960 = vmatpush.msra.mxu0 0.0
    %961 = vmatpush.msra.mxu0 0.0
    %962 = vmatpush.msra.mxu0 0.0
    %963 = vmatpush.msra.mxu0 0.0
    %964 = vmatpush.msra.mxu0 0.0
    %965 = vmatpush.msra.mxu0 0.0
    %966 = vmatpush.msra.mxu0 0.0
    %967 = vmatpush.msra.mxu0 0.0
    %968 = vmatpush.msra.mxu0 0.0
    %969 = vmatpush.msra.mxu0 0.0
    %970 = vmatpush.msra.mxu0 0.0
    %v971 = vand.u32 %v876, 4294901760
    %v972 = vsub.f32 %v876, %v971
    %973 = vmatpush.msra.mxu0 %v972
    %v974 = vand.u32 %v875, 4294901760
    %v975 = vsub.f32 %v875, %v974
    %976 = vmatpush.msra.mxu0 %v975
    %v977 = vand.u32 %v874, 4294901760
    %v978 = vsub.f32 %v874, %v977
    %979 = vmatpush.msra.mxu0 %v978
    %v980 = vand.u32 %v873, 4294901760
    %v981 = vsub.f32 %v873, %v980
    %982 = vmatpush.msra.mxu0 %v981
    %v983 = vand.u32 %v887, 4294901760
    %v984 = vsub.f32 %v887, %v983
    %985 = vmatmul.f32.gmra.mxu0 %v984
    %v986 = vpop.f32.mrf.mxu0
    %v987 = vadd.f32 %v957, %v986
    %988 = vdwg.mxu0
    %989 = vmatpush.msra.mxu0 0.0
    %990 = vmatpush.msra.mxu0 0.0
    %991 = vmatpush.msra.mxu0 0.0
    %992 = vmatpush.msra.mxu0 0.0
    %993 = vmatpush.msra.mxu0 0.0
    %994 = vmatpush.msra.mxu0 0.0
    %995 = vmatpush.msra.mxu0 0.0
    %996 = vmatpush.msra.mxu0 0.0
    %997 = vmatpush.msra.mxu0 0.0
    %998 = vmatpush.msra.mxu0 0.0
    %999 = vmatpush.msra.mxu0 0.0
    %1000 = vmatpush.msra.mxu0 0.0
    %v1001 = vand.u32 %v876, 4294901760
    %1002 = vmatpush.msra.mxu0 %v1001
    %v1003 = vand.u32 %v875, 4294901760
    %1004 = vmatpush.msra.mxu0 %v1003
    %v1005 = vand.u32 %v874, 4294901760
    %1006 = vmatpush.msra.mxu0 %v1005
    %v1007 = vand.u32 %v873, 4294901760
    %1008 = vmatpush.msra.mxu0 %v1007
    %v1009 = vand.u32 %v887, 4294901760
    %v1010 = vsub.f32 %v887, %v1009
    %v1011 = vand.u32 %v1010, 4294901760
    %1012 = vmatmul.f32.gmra.mxu0 %v1011
    %v1013 = vpop.f32.mrf.mxu0
    %v1014 = vadd.f32 %v987, %v1013
    %1015 = vdwg.mxu0
    %1016 = vmatpush.msra.mxu0 0.0
    %1017 = vmatpush.msra.mxu0 0.0
    %1018 = vmatpush.msra.mxu0 0.0
    %1019 = vmatpush.msra.mxu0 0.0
    %1020 = vmatpush.msra.mxu0 0.0
    %1021 = vmatpush.msra.mxu0 0.0
    %1022 = vmatpush.msra.mxu0 0.0
    %1023 = vmatpush.msra.mxu0 0.0
    %1024 = vmatpush.msra.mxu0 0.0
    %1025 = vmatpush.msra.mxu0 0.0
    %1026 = vmatpush.msra.mxu0 0.0
    %1027 = vmatpush.msra.mxu0 0.0
    %v1028 = vand.u32 %v876, 4294901760
    %v1029 = vsub.f32 %v876, %v1028
    %v1030 = vand.u32 %v1029, 4294901760
    %1031 = vmatpush.msra.mxu0 %v1030
    %v1032 = vand.u32 %v875, 4294901760
    %v1033 = vsub.f32 %v875, %v1032
    %v1034 = vand.u32 %v1033, 4294901760
    %1035 = vmatpush.msra.mxu0 %v1034
    %v1036 = vand.u32 %v874, 4294901760
    %v1037 = vsub.f32 %v874, %v1036
    %v1038 = vand.u32 %v1037, 4294901760
    %1039 = vmatpush.msra.mxu0 %v1038
    %v1040 = vand.u32 %v873, 4294901760
    %v1041 = vsub.f32 %v873, %v1040
    %v1042 = vand.u32 %v1041, 4294901760
    %1043 = vmatpush.msra.mxu0 %v1042
    %v1044 = vand.u32 %v887, 4294901760
    %1045 = vmatmul.f32.gmra.mxu0 %v1044
    %v1046 = vpop.f32.mrf.mxu0
    %v1047 = vadd.f32 %v1014, %v1046
    %1048 = vdwg.mxu0
    %1049 = vmatpush.msra.mxu0 0.0
    %1050 = vmatpush.msra.mxu0 0.0
    %1051 = vmatpush.msra.mxu0 0.0
    %1052 = vmatpush.msra.mxu0 0.0
    %1053 = vmatpush.msra.mxu0 0.0
    %1054 = vmatpush.msra.mxu0 0.0
    %1055 = vmatpush.msra.mxu0 0.0
    %1056 = vmatpush.msra.mxu0 0.0
    %1057 = vmatpush.msra.mxu0 0.0
    %1058 = vmatpush.msra.mxu0 0.0
    %1059 = vmatpush.msra.mxu0 0.0
    %1060 = vmatpush.msra.mxu0 0.0
    %v1061 = vand.u32 %v876, 4294901760
    %1062 = vmatpush.msra.mxu0 %v1061
    %v1063 = vand.u32 %v875, 4294901760
    %1064 = vmatpush.msra.mxu0 %v1063
    %v1065 = vand.u32 %v874, 4294901760
    %1066 = vmatpush.msra.mxu0 %v1065
    %v1067 = vand.u32 %v873, 4294901760
    %1068 = vmatpush.msra.mxu0 %v1067
    %v1069 = vand.u32 %v887, 4294901760
    %1070 = vmatmul.f32.gmra.mxu0 %v1069
    %v1071 = vpop.f32.mrf.mxu0
    %v1072 = vadd.f32 %v1047, %v1071
    %1073 = vdwg.mxu0
    %vm1074 = vcmask 122880
    %1075 = vst.msk [vmem:[#allocation3] sm:$0x1] %vm1074, %v1072
    // Predicated region
    $region30: #{_forward_impl.1} parent=1 // pred_check
      _
    $region31: #{_forward_impl.1} parent=1 // pred_check_branch
      %1077 = sbr.rel (0) target = $region33
    $region32: #{_forward_impl.1} parent=1 // pred_region
      %1079 = vsyncadd [#allocation4], 0
      %s1081 = sshll.u32 [#allocation3], 4
      %s1082 = int_to_ptr.vmem [resolvable:$true] %s1081
      %s1083 = sshll.u32 %s7, 4
      %s1084 = int_to_ptr.hbm [resolvable:$true] %s1083
      %1086 = dma.vmem_to_hbm [thread:$0]  %s1082, 16, %s1084, [#allocation4]
    $region33: #{_forward_impl.1} parent=1 // pred_fallthru
      _
    // Predicated region
    $region34: #{_forward_impl.1} parent=1 // pred_check
      _
    $region35: #{_forward_impl.1} parent=1 // pred_check_branch
      %1088 = sbr.rel (0) target = $region37
    $region36: #{_forward_impl.1} parent=1 // pred_region
      %1090 = dma.done [#allocation4], 16
    $region37: #{_forward_impl.1} parent=1 // pred_fallthru
      _
    %1091 = vsyncpa [#allocation4], 1

</llo_original>
